<compile_context>
chip_gen: v7x
topology: tpu7x:2x2x1
jax: 0.10.0
libtpu: 0.0.40
codegen_flags: <defaults>
</compile_context>

<pallas_src>
import functools

import jax
import jax.numpy as jnp
from jax.experimental import pallas as pl
from jax.experimental.pallas import tpu as pltpu

EPS = 1e-5


def _round_up(n, m):
    return ((n + m - 1) // m) * m


def _prenorm_linear_kernel(x_ref, g_ref, b_ref, w_ref, bias_ref, o_ref):
    # NOTE: for partial (masked) row/col tiles the out-of-bounds rows of x /
    # columns of w contain garbage; LN + matmul keep that garbage confined to
    # the masked output rows/cols (contraction is over the full D axis), so no
    # explicit NaN handling is needed here.
    x = x_ref[...].astype(jnp.float32)

    # Fused single-pass LayerNorm stats (biased variance, eps inside rsqrt,
    # matching torch.nn.LayerNorm).
    mean = jnp.mean(x, axis=-1, keepdims=True)
    mean_sq = jnp.mean(x * x, axis=-1, keepdims=True)
    var = mean_sq - mean * mean
    y = (x - mean) * jax.lax.rsqrt(var + EPS)
    y = y * g_ref[...] + b_ref[...]                  # gamma/beta already f32

    # Matmul in the weights' (bf16) dtype on the MXU, f32 accumulation.
    y = y.astype(w_ref.dtype)
    out = jnp.dot(y, w_ref[...], preferred_element_type=jnp.float32)
    out = out + bias_ref[...]                        # bias already f32
    o_ref[...] = out.astype(o_ref.dtype)


@functools.partial(jax.jit, static_argnames=("tm", "tn"))
def prenorm_linear(x, gamma, beta, w, bias, *, tm=256, tn=512):
    """PreNorm(dim, Linear(dim, hidden)) forward.

    x: (B, S, D); gamma/beta: (D,); w: (D, H); bias: (H,)  ->  (B, S, H)
    """
    B, S, D = x.shape
    H = w.shape[1]
    M = B * S

    # Never run the MXU in f32: pre-cast f32 weights to bf16 once.
    compute_dtype = jnp.bfloat16 if w.dtype == jnp.float32 else w.dtype
    w_c = w.astype(compute_dtype)

    # Row tile: multiple of 16 (covers f32 (8,128) and bf16 (16,128) packing),
    # or the full M (always legal).  Output-column tile: multiple of 128
    # (lane-dense, unmasked vst), or the full H.
    tm_eff = M if M <= tm else _round_up(tm, 16)
    tn_eff = H if H <= tn else _round_up(tn, 128)

    grid_m = pl.cdiv(M, tm_eff)
    grid_n = pl.cdiv(H, tn_eff)
    # Megacore (v7x): make sure there are >= 2 parallel tiles when possible.
    if grid_m * grid_n < 2 and M >= 32:
        tm_eff = _round_up(-(-M // 2), 16)
        grid_m = pl.cdiv(M, tm_eff)

    x2 = x.reshape(M, D)
    g2 = gamma.astype(jnp.float32).reshape(1, D)
    b2 = beta.astype(jnp.float32).reshape(1, D)
    bias2 = bias.astype(jnp.float32).reshape(1, H)

    # Explicit VMEM budget: double-buffered x / w / bias / out tiles plus the
    # resident gamma/beta rows, with headroom.  Keeps bigger tiles working on
    # v5e's 16 MiB scoped default without exceeding v7x's 64 MiB physical VMEM.
    x_bytes = jnp.dtype(x.dtype).itemsize
    w_bytes = jnp.dtype(compute_dtype).itemsize
    o_bytes = jnp.dtype(x.dtype).itemsize
    est = 2 * (tm_eff * D * x_bytes + D * tn_eff * w_bytes
               + tn_eff * 4 + tm_eff * tn_eff * o_bytes) + 2 * D * 4
    vmem_limit = min(max(2 * est, 32 << 20), 48 << 20)

    out2 = pl.pallas_call(
        _prenorm_linear_kernel,
        out_shape=jax.ShapeDtypeStruct((M, H), x.dtype),
        grid_spec=pltpu.PrefetchScalarGridSpec(
            num_scalar_prefetch=0,
            grid=(grid_m, grid_n),
            in_specs=[
                pl.BlockSpec((tm_eff, D), lambda i, j: (i, 0)),   # x row tile (resident over j)
                pl.BlockSpec((1, D), lambda i, j: (0, 0)),        # gamma (resident)
                pl.BlockSpec((1, D), lambda i, j: (0, 0)),        # beta  (resident)
                pl.BlockSpec((D, tn_eff), lambda i, j: (0, j)),   # weight H-tile
                pl.BlockSpec((1, tn_eff), lambda i, j: (0, j)),   # bias   H-tile
            ],
            out_specs=pl.BlockSpec((tm_eff, tn_eff), lambda i, j: (i, j)),
        ),
        compiler_params=pltpu.CompilerParams(
            # No cross-step dependency (LN recomputed per step), so both axes
            # are safe to shard across TensorCores.
            dimension_semantics=("parallel", "parallel"),
            vmem_limit_bytes=int(vmem_limit)),
    )(x2, g2, b2, w_c, bias2)

    return out2.reshape(B, S, H)


def _reference(x, gamma, beta, w, bias):
    """Pure-JAX reference matching the kernel's precision policy."""
    compute_dtype = jnp.bfloat16 if w.dtype == jnp.float32 else w.dtype
    xf = x.astype(jnp.float32)
    mean = jnp.mean(xf, axis=-1, keepdims=True)
    var = jnp.mean(xf * xf, axis=-1, keepdims=True) - mean * mean
    y = (xf - mean) * jax.lax.rsqrt(var + EPS)
    y = y * gamma.astype(jnp.float32) + beta.astype(jnp.float32)
    y = y.astype(compute_dtype)
    out = jnp.dot(y, w.astype(compute_dtype), preferred_element_type=jnp.float32)
    out = out + bias.astype(jnp.float32)
    return out.astype(x.dtype)


if __name__ == "__main__":
    # TODO(synk): `fn` in PreNorm is arbitrary; here it is a Linear(dim, hidden)
    # (the first op of the ViT Attention / FeedForward blocks it wraps).
    B, S, D, H = 2, 8, 32, 64

    key = jax.random.PRNGKey(0)
    kx, kw, kb, kg, kbeta = jax.random.split(key, 5)

    x = jax.random.normal(kx, (B, S, D), dtype=jnp.float32)
    gamma = jnp.ones((D,), jnp.float32) + 0.1 * jax.random.normal(kg, (D,), jnp.float32)
    beta = 0.1 * jax.random.normal(kbeta, (D,), jnp.float32)
    w = jax.random.normal(kw, (D, H), dtype=jnp.float32) / jnp.sqrt(D)
    bias = 0.1 * jax.random.normal(kb, (H,), dtype=jnp.float32)

    # --- f32 inputs (weights pre-cast to bf16 inside the wrapper) ---
    out = jax.block_until_ready(prenorm_linear(x, gamma, beta, w, bias))
    ref = _reference(x, gamma, beta, w, bias)
    assert out.shape == (B, S, H)
    assert jnp.allclose(out, ref, atol=3e-2, rtol=3e-2), "f32 mismatch vs reference"

    # --- bf16 weights / activations path ---
    xb = x.astype(jnp.bfloat16)
    gb, bb = gamma.astype(jnp.bfloat16), beta.astype(jnp.bfloat16)
    wb, biasb = w.astype(jnp.bfloat16), bias.astype(jnp.bfloat16)
    outb = jax.block_until_ready(prenorm_linear(xb, gb, bb, wb, biasb))
    refb = _reference(xb, gb, bb, wb, biasb)
    assert outb.shape == (B, S, H)
    assert jnp.allclose(outb.astype(jnp.float32), refb.astype(jnp.float32),
                        atol=7e-2, rtol=7e-2), "bf16 mismatch vs reference"

    print("KERNEL_OK")
</pallas_src>

<mosaic_0001>
module attributes {stable_mosaic.version = 11 : i64} {
  func.func @_prenorm_linear_kernel(%arg0: i32, %arg1: i32, %arg2: memref<16x32xf32, #tpu.memory_space<vmem>>, %arg3: memref<1x32xf32, #tpu.memory_space<vmem>>, %arg4: memref<1x32xf32, #tpu.memory_space<vmem>>, %arg5: memref<32x64xbf16, #tpu.memory_space<vmem>>, %arg6: memref<1x64xf32, #tpu.memory_space<vmem>>, %arg7: memref<16x64xf32, #tpu.memory_space<vmem>>) attributes {dimension_semantics = [#tpu.dimension_semantics<parallel>, #tpu.dimension_semantics<parallel>], iteration_bounds = array<i64: 1, 1>, scalar_prefetch = 0 : i64, scratch_operands = 0 : i64, tpu.core_type = #tpu.core_type<tc>, window_params = [{transform_indices = @transform_0, window_bounds = array<i64: 16, 32>}, {pipeline_mode = #tpu.pipeline_mode<synchronous>, transform_indices = @transform_1, window_bounds = array<i64: 1, 32>}, {pipeline_mode = #tpu.pipeline_mode<synchronous>, transform_indices = @transform_2, window_bounds = array<i64: 1, 32>}, {transform_indices = @transform_3, window_bounds = array<i64: 32, 64>}, {transform_indices = @transform_4, window_bounds = array<i64: 1, 64>}, {transform_indices = @transform_5, window_bounds = array<i64: 16, 64>}]} {
    %c0 = arith.constant 0 : index
    %c0_0 = arith.constant 0 : index
    %0 = vector.load %arg2[%c0, %c0_0] : memref<16x32xf32, #tpu.memory_space<vmem>>, vector<16x32xf32>
    %cst = arith.constant dense<0.000000e+00> : vector<16xf32>
    %1 = vector.multi_reduction <add>, %0, %cst [1] : vector<16x32xf32> to vector<16xf32>
    %2 = vector.shape_cast %1 : vector<16xf32> to vector<16x1xf32>
    %cst_1 = arith.constant 3.200000e+01 : f32
    %3 = vector.broadcast %cst_1 : f32 to vector<16x1xf32>
    %4 = arith.divf %2, %3 : vector<16x1xf32>
    %5 = arith.mulf %0, %0 : vector<16x32xf32>
    %cst_2 = arith.constant dense<0.000000e+00> : vector<16xf32>
    %6 = vector.multi_reduction <add>, %5, %cst_2 [1] : vector<16x32xf32> to vector<16xf32>
    %7 = vector.shape_cast %6 : vector<16xf32> to vector<16x1xf32>
    %cst_3 = arith.constant 3.200000e+01 : f32
    %8 = vector.broadcast %cst_3 : f32 to vector<16x1xf32>
    %9 = arith.divf %7, %8 : vector<16x1xf32>
    %10 = arith.mulf %4, %4 : vector<16x1xf32>
    %11 = arith.subf %9, %10 : vector<16x1xf32>
    %12 = vector.broadcast %4 : vector<16x1xf32> to vector<16x32xf32>
    %13 = arith.subf %0, %12 : vector<16x32xf32>
    %cst_4 = arith.constant 9.99999974E-6 : f32
    %14 = vector.broadcast %cst_4 : f32 to vector<16x1xf32>
    %15 = arith.addf %11, %14 : vector<16x1xf32>
    %16 = math.rsqrt %15 : vector<16x1xf32>
    %17 = vector.broadcast %16 : vector<16x1xf32> to vector<16x32xf32>
    %18 = arith.mulf %13, %17 : vector<16x32xf32>
    %c0_5 = arith.constant 0 : index
    %c0_6 = arith.constant 0 : index
    %19 = vector.load %arg3[%c0_5, %c0_6] : memref<1x32xf32, #tpu.memory_space<vmem>>, vector<1x32xf32>
    %20 = vector.broadcast %19 : vector<1x32xf32> to vector<16x32xf32>
    %21 = arith.mulf %18, %20 : vector<16x32xf32>
    %c0_7 = arith.constant 0 : index
    %c0_8 = arith.constant 0 : index
    %22 = vector.load %arg4[%c0_7, %c0_8] : memref<1x32xf32, #tpu.memory_space<vmem>>, vector<1x32xf32>
    %23 = vector.broadcast %22 : vector<1x32xf32> to vector<16x32xf32>
    %24 = arith.addf %21, %23 : vector<16x32xf32>
    %25 = arith.truncf %24 : vector<16x32xf32> to vector<16x32xbf16>
    %c0_9 = arith.constant 0 : index
    %c0_10 = arith.constant 0 : index
    %26 = vector.load %arg5[%c0_9, %c0_10] : memref<32x64xbf16, #tpu.memory_space<vmem>>, vector<32x64xbf16>
    %cst_11 = arith.constant dense<0.000000e+00> : vector<16x64xf32>
    %27 = tpu.matmul %25, %26, %cst_11 {dimension_numbers = #tpu.dot_dimension_numbers<[1], [0], [0], [1], [0, 0, 1, 1], [], []>} : vector<16x32xbf16>, vector<32x64xbf16>, vector<16x64xf32> -> vector<16x64xf32>
    %c0_12 = arith.constant 0 : index
    %c0_13 = arith.constant 0 : index
    %28 = vector.load %arg6[%c0_12, %c0_13] : memref<1x64xf32, #tpu.memory_space<vmem>>, vector<1x64xf32>
    %29 = vector.broadcast %28 : vector<1x64xf32> to vector<16x64xf32>
    %30 = arith.addf %27, %29 : vector<16x64xf32>
    %c0_14 = arith.constant 0 : index
    %c0_15 = arith.constant 0 : index
    %31 = vector.load %arg7[%c0_14, %c0_15] : memref<16x64xf32, #tpu.memory_space<vmem>>, vector<16x64xf32>
    tpu.vector_store %arg7[%c0_14, %c0_15], %30 {strides = array<i32>} : memref<16x64xf32, #tpu.memory_space<vmem>>, vector<16x64xf32>,
    return
  }
  func.func @transform_0(%arg0: i32, %arg1: i32) -> (i32, i32) {
    %c0_i32 = arith.constant 0 : i32
    %c0_i32_0 = arith.constant 0 : i32
    return %arg0, %c0_i32 : i32, i32
  }
  func.func @transform_1(%arg0: i32, %arg1: i32) -> (i32, i32) {
    %c0_i32 = arith.constant 0 : i32
    %c0_i32_0 = arith.constant 0 : i32
    %c0_i32_1 = arith.constant 0 : i32
    return %c0_i32, %c0_i32_0 : i32, i32
  }
  func.func @transform_2(%arg0: i32, %arg1: i32) -> (i32, i32) {
    %c0_i32 = arith.constant 0 : i32
    %c0_i32_0 = arith.constant 0 : i32
    %c0_i32_1 = arith.constant 0 : i32
    return %c0_i32, %c0_i32_0 : i32, i32
  }
  func.func @transform_3(%arg0: i32, %arg1: i32) -> (i32, i32) {
    %c0_i32 = arith.constant 0 : i32
    %c0_i32_0 = arith.constant 0 : i32
    return %c0_i32, %arg1 : i32, i32
  }
  func.func @transform_4(%arg0: i32, %arg1: i32) -> (i32, i32) {
    %c0_i32 = arith.constant 0 : i32
    %c0_i32_0 = arith.constant 0 : i32
    return %c0_i32, %arg1 : i32, i32
  }
  func.func @transform_5(%arg0: i32, %arg1: i32) -> (i32, i32) {
    %c0_i32 = arith.constant 0 : i32
    return %arg0, %arg1 : i32, i32
  }
}

</mosaic_0001>

<llo_original>
// kernel: prenorm_linear.1
$region0: #{prenorm_linear.1}
  #allocation0 [shape = 'u32[]', space=smem, size = 0x4, offset = 0x4, fixed_abs, tag = 'smem constant byte address 0x4 - core index']
  #allocation1 [shape = 'u32[144,128]{1,0:T(1,128)}', space=vmem, size = 0x12000, scoped, tag = 'internal scratch']
  %s0 = inlined_call_operand.vmem [shape: f32[16,32], index: 0, kind: input, shape index: {}]
  %s1 = inlined_call_operand.vmem [shape: f32[1,32], index: 1, kind: input, shape index: {}]
  %s2 = inlined_call_operand.vmem [shape: f32[1,32], index: 2, kind: input, shape index: {}]
  %s3 = inlined_call_operand.vmem [shape: bf16[32,64], index: 3, kind: input, shape index: {}]
  %s4 = inlined_call_operand.vmem [shape: f32[1,64], index: 4, kind: input, shape index: {}]
  %s5 = inlined_call_operand.hbm [shape: f32[16,64], index: 5, kind: output, shape index: {}]
  %s6 = sld [smem:[#allocation0]]
  $region30: #{prenorm_linear.1} parent=0
    _
  %s8 = ssub.s32 1, %s6
  %s9 = scalar_select 0, %s8, %s6
  $region1: #{prenorm_linear.1} parent=0
    #allocation2 [shape = 'u8[8192]{0}', space=vmem, size = 0x2000, scoped, tag = 'output window, operand 0, single buffered']
    #allocation3 [shape = 's32[1]{0}', space=sflag, size = 0x4, scoped, tag = 'scoped memory for prenorm_linear.1']
    %10 = vsyncpa [#allocation3], 0
    // Predicated region
    $region2: #{prenorm_linear.1} parent=1 // pred_check
      _
    $region3: #{prenorm_linear.1} parent=1 // pred_check_branch
      %12 = sbr.rel (0) target = $region5
    $region4: #{prenorm_linear.1} parent=1 // pred_region
      _
    $region5: #{prenorm_linear.1} parent=1 // pred_fallthru
      _
    // Predicated region
    $region6: #{prenorm_linear.1} parent=1 // pred_check
      _
    $region7: #{prenorm_linear.1} parent=1 // pred_check_branch
      %14 = sbr.rel (0) target = $region9
    $region8: #{prenorm_linear.1} parent=1 // pred_region
      _
    $region9: #{prenorm_linear.1} parent=1 // pred_fallthru
      _
    // Predicated region
    $region10: #{prenorm_linear.1} parent=1 // pred_check
      _
    $region11: #{prenorm_linear.1} parent=1 // pred_check_branch
      %16 = sbr.rel (0) target = $region13
    $region12: #{prenorm_linear.1} parent=1 // pred_region
      _
    $region13: #{prenorm_linear.1} parent=1 // pred_fallthru
      _
    // Predicated region
    $region14: #{prenorm_linear.1} parent=1 // pred_check
      _
    $region15: #{prenorm_linear.1} parent=1 // pred_check_branch
      %18 = sbr.rel (0) target = $region17
    $region16: #{prenorm_linear.1} parent=1 // pred_region
      _
    $region17: #{prenorm_linear.1} parent=1 // pred_fallthru
      _
    // Predicated region
    $region18: #{prenorm_linear.1} parent=1 // pred_check
      _
    $region19: #{prenorm_linear.1} parent=1 // pred_check_branch
      %20 = sbr.rel (0) target = $region21
    $region20: #{prenorm_linear.1} parent=1 // pred_region
      _
    $region21: #{prenorm_linear.1} parent=1 // pred_fallthru
      _
    %v22 = vld [vmem:[%s0] sm:$0xff]
    %v23 = vld [vmem:[%s0 + $0x8] sm:$0xff]
    %vm24 = vcmask 261120
    %v25 = vsel %vm24, %v22, 0.0
    %26 = vadd.xlane.f32.xlu0 %v25
    %v27 = vpop.xlane.xlu0 %26
    %v28 = vsel %vm24, %v23, 0.0
    %29 = vadd.xlane.f32.xlu0 %v28
    %v30 = vpop.xlane.xlu0 %29
    %v31 = vrcp.pop 32.0
    %v32 = vmul.f32 %v27, %v31
    %v33 = vmul.f32 %v30, %v31
    %v34 = vmul.f32 %v22, %v22
    %v35 = vmul.f32 %v23, %v23
    %v36 = vsel %vm24, %v34, 0.0
    %37 = vadd.xlane.f32.xlu0 %v36
    %v38 = vpop.xlane.xlu0 %37
    %v39 = vsel %vm24, %v35, 0.0
    %40 = vadd.xlane.f32.xlu0 %v39
    %v41 = vpop.xlane.xlu0 %40
    %v42 = vmul.f32 %v38, %v31
    %v43 = vmul.f32 %v41, %v31
    %v44 = vmul.f32 %v32, %v32
    %v45 = vmul.f32 %v33, %v33
    %v46 = vsub.f32 %v42, %v44
    %v47 = vsub.f32 %v43, %v45
    %v48 = vsub.f32 %v22, %v32
    %v49 = vsub.f32 %v23, %v33
    %v50 = vadd.f32 %v46, 1e-05
    %v51 = vadd.f32 %v47, 1e-05
    %v52 = vrsqrt.pop %v50
    %v53 = vrsqrt.pop %v51
    %v54 = vmul.f32 %v48, %v52
    %v55 = vmul.f32 %v49, %v53
    %v56 = vld [vmem:[%s1] sm:$0x1]
    %v58 = vlaneseq
    %v59 = vshrl.u32 %v58, 7
    %v60 = vsub.s32 0, %v59
    %v61 = vrot.slane %v56, %v60
    %v63 = vmul.f32 %v54, %v61
    %v64 = vmul.f32 %v55, %v61
    %v65 = vld [vmem:[%s2] sm:$0x1]
    %v67 = vlaneseq
    %v68 = vshrl.u32 %v67, 7
    %v69 = vsub.s32 0, %v68
    %v70 = vrot.slane %v65, %v69
    %v72 = vadd.f32 %v63, %v70
    %v73 = vadd.f32 %v64, %v70
    %v74 = vpack.c.bf16 %v73, %v72
    %v75 = vld [vmem:[%s3] sm:$0xf]
    %v76 = vld [vmem:[%s3 + $0x4] sm:$0xf]
    %v77 = vld [vmem:[%s3 + $0x8] sm:$0xf]
    %v78 = vld [vmem:[%s3 + $0xc] sm:$0xf]
    %v79 = vld [vmem:[%s4] sm:$0x1]
    %v81 = vlaneseq
    %v82 = vshrl.u32 %v81, 7
    %v83 = vsub.s32 0, %v82
    %v84 = vrot.slane %v79, %v83
    %v90 = vunpack.c.l.b16 %v75
    %v91 = vunpack.c.l.b16 %v76
    %v92 = vunpack.c.l.b16 %v77
    %v93 = vunpack.c.l.b16 %v78
    %v94 = vpack.c.b16 %v91, %v90
    %v95 = vpack.c.b16 %v93, %v92
    %v99 = vsel %vm24, %v74, 0
    %101 = vmatprep.subr.bf16.mxu0 0
    %102 = vmatpush1.bf16.msra.mxu0 %v94
    %103 = vmatprep.subr.bf16.mxu0 0
    %104 = vmatpush1.bf16.msra.mxu0 %v95
    %105 = vmatprep.subr.bf16.mxu0 0
    %106 = vmatpush1.bf16.msra.mxu0 0
    %107 = vmatprep.subr.bf16.mxu0 0
    %108 = vmatpush1.bf16.msra.mxu0 0
    %109 = vmatprep.subr.bf16.mxu0 0
    %110 = vmatpush1.bf16.msra.mxu0 0
    %111 = vmatprep.subr.bf16.mxu0 0
    %112 = vmatpush1.bf16.msra.mxu0 0
    %113 = vmatprep.subr.bf16.mxu0 0
    %114 = vmatpush1.bf16.msra.mxu0 0
    %115 = vmatprep.subr.bf16.mxu0 0
    %116 = vmatpush1.bf16.msra.mxu0 0
    %117 = vmatprep.subr.bf16.mxu0 0
    %118 = vmatpush1.bf16.msra.mxu0 0
    %119 = vmatprep.subr.bf16.mxu0 0
    %120 = vmatpush1.bf16.msra.mxu0 0
    %121 = vmatprep.subr.bf16.mxu0 0
    %122 = vmatpush1.bf16.msra.mxu0 0
    %123 = vmatprep.subr.bf16.mxu0 0
    %124 = vmatpush1.bf16.msra.mxu0 0
    %125 = vmatprep.subr.bf16.mxu0 0
    %126 = vmatpush1.bf16.msra.mxu0 0
    %127 = vmatprep.subr.bf16.mxu0 0
    %128 = vmatpush1.bf16.msra.mxu0 0
    %129 = vmatprep.subr.bf16.mxu0 0
    %130 = vmatpush1.bf16.msra.mxu0 0
    %131 = vmatprep.subr.bf16.mxu0 0
    %132 = vmatpush1.bf16.msra.mxu0 0
    %133 = vmatprep.mubr.bf16.mxu0 0
    %134 = vmatmul.mubr.bf16.gmra.mrb[0].mxu0 %v99
    %v135 = vpop.f32.mrb[0].mxu0
    %v136 = vadd.f32 %v84, %v135
    %v137 = vpop.f32.mrb[0].mxu0
    %v138 = vpop.f32.mrb[0].mxu0
    %v139 = vadd.f32 %v84, %v138
    %v140 = vpop.f32.mrb[0].mxu0
    %141 = vdwg.mxu0
    %vm142 = vcmask 523264
    %143 = vst.msk [vmem:[#allocation2] sm:$0xff] %vm142, %v136
    %144 = vst.msk [vmem:[#allocation2 + $0x8] sm:$0xff] %vm142, %v139
    // Predicated region
    $region22: #{prenorm_linear.1} parent=1 // pred_check
      _
    $region23: #{prenorm_linear.1} parent=1 // pred_check_branch
      %146 = sbr.rel (0) target = $region25
    $region24: #{prenorm_linear.1} parent=1 // pred_region
      %s148 = ssub.s32 256, 256
      %149 = vsyncadd [#allocation3], %s148
      %s150 = sshll.u32 [#allocation2], 4
      %s151 = int_to_ptr.vmem [resolvable:$true] %s150
      %156 = dma.vmem_to_hbm [thread:$0]  %s151, 256, %s5, [#allocation3], 128, 128, 8
    $region25: #{prenorm_linear.1} parent=1 // pred_fallthru
      _
    // Predicated region
    $region26: #{prenorm_linear.1} parent=1 // pred_check
      _
    $region27: #{prenorm_linear.1} parent=1 // pred_check_branch
      %158 = sbr.rel (0) target = $region29
    $region28: #{prenorm_linear.1} parent=1 // pred_region
      %159 = dma.done [#allocation3], 256
    $region29: #{prenorm_linear.1} parent=1 // pred_fallthru
      _
    %160 = vsyncpa [#allocation3], 1

</llo_original>
